<compile_context>
chip_gen: v7x
topology: tpu7x:2x2x1
jax: 0.10.0
libtpu: 0.0.40
codegen_flags: <defaults>
</compile_context>

<pallas_src>
import functools

import jax
import jax.numpy as jnp
from jax.experimental import pallas as pl
from jax.experimental.pallas import tpu as pltpu


def _round_up(x, m):
    return (x + m - 1) // m * m


# ----------------------------------------------------------------------------
# Pallas kernel: fused [mean|logv] projection + reparameterize + decode linear
# ----------------------------------------------------------------------------
def _latent_kernel(*refs, sampling):
    if sampling:
        (h_ref, wml_ref, bml_ref, wd_ref, bd_ref, eps_ref,
         ml_ref, z_ref, dec_ref) = refs
    else:
        (h_ref, wml_ref, bml_ref, wd_ref, bd_ref,
         ml_ref, z_ref, dec_ref) = refs
        eps_ref = None

    ef = h_ref.shape[0]          # enc_factor (static)
    lp = z_ref.shape[-1]         # padded latent width (multiple of 128)

    # Fused [mean | logv] projection: single (tb, 2*lp) f32 accumulation.
    # The contraction over the flattened hidden (H = ef * d_hidden) is done as a
    # sum over enc_factor slices, so no in-kernel transpose of the RNN layout.
    acc = jnp.dot(h_ref[0], wml_ref[0], preferred_element_type=jnp.float32)
    for f in range(1, ef):
        acc = acc + jnp.dot(h_ref[f], wml_ref[f],
                            preferred_element_type=jnp.float32)
    ml = acc + bml_ref[...]                       # (tb, 2*lp) = [mean | logv]
    ml_ref[...] = ml

    mean = ml[:, :lp]
    if sampling:
        logv = ml[:, lp:]
        z = mean + eps_ref[...] * jnp.exp(0.5 * logv)   # reparameterize (is_logv)
    else:
        z = mean
    z_ref[...] = z

    # latent -> decode init, written directly in (enc_factor, batch, d_hidden)
    # layout.  Padded latent rows of wd are zero, so padded z lanes are inert.
    z_lo = z.astype(wd_ref.dtype)
    for f in range(ef):
        dec_ref[f] = (jnp.dot(z_lo, wd_ref[f], preferred_element_type=jnp.float32)
                      + bd_ref[f]).astype(dec_ref.dtype)


# ----------------------------------------------------------------------------
# pallas_call wrapper: batch grid, resident weights, explicit VMEM budget
# ----------------------------------------------------------------------------
def _choose_batch_tile(B, ef, d_h, Lp, budget_bytes=16 * (1 << 20)):
    """Largest batch tile whose double-buffered VMEM footprint fits the budget
    (budget sized so it also fits v7x's 32 MiB scoped / 64 MiB physical VMEM)."""
    def est(tb):
        per_row = (ef * d_h * 2          # hidden tile (bf16)
                   + Lp * 4              # eps tile (f32)
                   + 2 * Lp * 4          # [mean|logv] out (f32)
                   + Lp * 4              # z out (f32)
                   + ef * d_h * 4)       # decode out (f32)
        resident = (ef * d_h * 2 * Lp * 2 + 2 * Lp * 4     # fused proj W + b
                    + ef * Lp * d_h * 2 + ef * d_h * 4)    # decode W + b
        return 2 * (tb * per_row + resident)               # x2: double buffering

    tb = B if B <= 512 else 512
    while tb > 8 and est(tb) > budget_bytes:
        tb = max(8, (tb // 2) // 8 * 8)
    return tb, est(tb)


def _fused_latent(h_k, w_ml, b_ml, w_dec, b_dec, eps, *, is_sampling):
    ef, B, d_h = h_k.shape
    lp2 = w_ml.shape[-1]
    lp = lp2 // 2
    tb, vmem_est = _choose_batch_tile(B, ef, d_h, lp)
    grid = (pl.cdiv(B, tb),)

    in_specs = [
        pl.BlockSpec((ef, tb, d_h), lambda i: (0, i, 0)),    # hidden (batch-tiled)
        pl.BlockSpec((ef, d_h, lp2), lambda i: (0, 0, 0)),   # fused [mean|logv] W (resident)
        pl.BlockSpec((1, lp2), lambda i: (0, 0)),            # fused bias
        pl.BlockSpec((ef, lp, d_h), lambda i: (0, 0, 0)),    # decode W (resident)
        pl.BlockSpec((ef, 1, d_h), lambda i: (0, 0, 0)),     # decode bias
    ]
    inputs = [h_k, w_ml, b_ml, w_dec, b_dec]
    if is_sampling:
        in_specs.append(pl.BlockSpec((tb, lp), lambda i: (i, 0)))   # eps
        inputs.append(eps)

    out_shape = (
        jax.ShapeDtypeStruct((B, lp2), jnp.float32),         # [mean | logv] slab
        jax.ShapeDtypeStruct((B, lp), jnp.float32),          # z (padded lanes)
        jax.ShapeDtypeStruct((ef, B, d_h), jnp.float32),     # decode init (RNN layout)
    )
    out_specs = (
        pl.BlockSpec((tb, lp2), lambda i: (i, 0)),
        pl.BlockSpec((tb, lp), lambda i: (i, 0)),
        pl.BlockSpec((ef, tb, d_h), lambda i: (0, i, 0)),
    )

    return pl.pallas_call(
        functools.partial(_latent_kernel, sampling=is_sampling),
        out_shape=out_shape,
        grid=grid,
        in_specs=in_specs,
        out_specs=out_specs,
        compiler_params=pltpu.CompilerParams(
            dimension_semantics=("parallel",),                       # v7x 2-TC sharding
            vmem_limit_bytes=int(max(vmem_est + (8 << 20), 32 << 20)),
        ),
    )(*inputs)


# ----------------------------------------------------------------------------
# Module wrapper (mirrors forward() semantics of SingleLatentConstructor)
# ----------------------------------------------------------------------------
class SingleLatentConstructorPallas:
    def __init__(self, d_hidden, latent_size, batch_first, bidir, enc_num_layers, key):
        self.d_hidden = int(d_hidden)
        self.latent_size = int(latent_size)
        self.batch_first = bool(batch_first)
        self.enc_factor = (2 if bidir else 1) * int(enc_num_layers)
        H = self.d_hidden * self.enc_factor
        L = self.latent_size
        Lp = _round_up(L, 128)
        self.latent_pad = Lp

        ks = jax.random.split(key, 6)

        # PyTorch nn.Linear default init: U(-1/sqrt(fan_in), 1/sqrt(fan_in)).
        def lin(kw, kb, fan_in, fan_out):
            bound = 1.0 / float(fan_in) ** 0.5
            w = jax.random.uniform(kw, (fan_in, fan_out), jnp.float32, -bound, bound)
            b = jax.random.uniform(kb, (fan_out,), jnp.float32, -bound, bound)
            return w, b

        w_mean, b_mean = lin(ks[0], ks[1], H, L)     # hidden2mean
        w_logv, b_logv = lin(ks[2], ks[3], H, L)     # hidden2logv
        w_dec,  b_dec  = lin(ks[4], ks[5], L, H)     # latent2decode
        # Keep f32 originals around (reference / export).
        self.w_mean, self.b_mean = w_mean, b_mean
        self.w_logv, self.b_logv = w_logv, b_logv
        self.w_dec,  self.b_dec  = w_dec,  b_dec

        ef, d_h = self.enc_factor, self.d_hidden
        # ---- fused, lane-padded, kernel-layout weights (built once) --------
        # [mean | logv] projection: (enc_factor, d_hidden, 2*Lp), bf16.
        w_ml = jnp.zeros((ef, d_h, 2 * Lp), jnp.float32)
        w_ml = w_ml.at[:, :, :L].set(w_mean.reshape(ef, d_h, L))
        w_ml = w_ml.at[:, :, Lp:Lp + L].set(w_logv.reshape(ef, d_h, L))
        self.w_ml = w_ml.astype(jnp.bfloat16)
        b_ml = jnp.zeros((1, 2 * Lp), jnp.float32)
        b_ml = b_ml.at[0, :L].set(b_mean)
        b_ml = b_ml.at[0, Lp:Lp + L].set(b_logv)
        self.b_ml = b_ml
        # decode: (enc_factor, Lp, d_hidden), bf16; padded latent rows are zero.
        w_d = jnp.zeros((ef, Lp, d_h), jnp.float32)
        w_d = w_d.at[:, :L, :].set(jnp.transpose(w_dec.reshape(L, ef, d_h), (1, 0, 2)))
        self.w_dec_k = w_d.astype(jnp.bfloat16)
        self.b_dec_k = b_dec.reshape(ef, 1, d_h)

    def __call__(self, input_ret, is_sampling, eps_key=None):
        ef, d_h = self.enc_factor, self.d_hidden
        L, Lp = self.latent_size, self.latent_pad

        hidden = jnp.asarray(input_ret['hidden'])
        if self.batch_first:
            hidden = jnp.transpose(hidden.reshape(-1, ef, d_h), (1, 0, 2))
        else:
            hidden = hidden.reshape(ef, -1, d_h)        # native RNN layout, no transpose
        B = hidden.shape[1]
        h_k = hidden.astype(jnp.bfloat16)

        if is_sampling:
            assert eps_key is not None, "sampling requires an eps PRNG key"
            eps = jax.random.normal(eps_key, (B, Lp), jnp.float32)
            # TODO(synk): move eps generation in-kernel (pltpu.prng_seed +
            # pltpu.stateful_normal) once jax.random-exact noise is not required.
        else:
            eps = None

        ml, z_pad, dec = _fused_latent(
            h_k, self.w_ml, self.b_ml, self.w_dec_k, self.b_dec_k, eps,
            is_sampling=bool(is_sampling))

        mean = ml[:, :L]
        logv = ml[:, Lp:Lp + L]
        z = z_pad[:, :L]

        if ef > 1:
            decode_init = dec if not self.batch_first else jnp.transpose(dec, (1, 0, 2))
        else:
            decode_init = dec[0]

        out = dict(input_ret)
        out['mean'] = mean
        out['logv'] = logv
        out['z'] = z
        out['decode_init'] = decode_init
        return out


# ----------------------------------------------------------------------------
# Demo
# ----------------------------------------------------------------------------
if __name__ == "__main__":
    d_hidden = 32
    latent_size = 16
    batch = 2
    bidir = True
    enc_num_layers = 1
    batch_first = False
    enc_factor = (2 if bidir else 1) * enc_num_layers

    key = jax.random.PRNGKey(0)
    k_param, k_hidden, k_eps = jax.random.split(key, 3)

    module = SingleLatentConstructorPallas(
        d_hidden=d_hidden, latent_size=latent_size, batch_first=batch_first,
        bidir=bidir, enc_num_layers=enc_num_layers, key=k_param)

    # RNN-style hidden: (enc_factor, batch, d_hidden) since batch_first=False
    hidden = jax.random.normal(k_hidden, (enc_factor, batch, d_hidden), jnp.float32)
    input_ret = {'hidden': hidden, 'batch_size': batch}

    out = module(input_ret, is_sampling=True, eps_key=k_eps)
    jax.block_until_ready(out['decode_init'])

    # ---- pure-JAX reference (same bf16 rounding points as the kernel) ------
    f32 = jnp.float32
    H = d_hidden * enc_factor
    Lp = module.latent_pad
    h_flat = jnp.transpose(hidden, (1, 0, 2)).reshape(batch, H)
    h_bf = h_flat.astype(jnp.bfloat16).astype(f32)
    wm = module.w_mean.astype(jnp.bfloat16).astype(f32)
    wv = module.w_logv.astype(jnp.bfloat16).astype(f32)
    wd = module.w_dec.astype(jnp.bfloat16).astype(f32)

    mean_ref = h_bf @ wm + module.b_mean
    logv_ref = h_bf @ wv + module.b_logv
    eps_full = jax.random.normal(k_eps, (batch, Lp), f32)
    z_ref = mean_ref + eps_full[:, :latent_size] * jnp.exp(0.5 * logv_ref)
    # decode reference uses the kernel's own z (replicates its bf16 cast exactly)
    dec_flat_ref = out['z'].astype(jnp.bfloat16).astype(f32) @ wd + module.b_dec
    dec_ref = jnp.transpose(dec_flat_ref.reshape(batch, enc_factor, d_hidden), (1, 0, 2))

    assert out['mean'].shape == (batch, latent_size)
    assert out['logv'].shape == (batch, latent_size)
    assert out['z'].shape == (batch, latent_size)
    assert out['decode_init'].shape == (enc_factor, batch, d_hidden)
    assert jnp.allclose(out['mean'], mean_ref, atol=2e-3, rtol=2e-3)
    assert jnp.allclose(out['logv'], logv_ref, atol=2e-3, rtol=2e-3)
    assert jnp.allclose(out['z'], z_ref, atol=2e-3, rtol=2e-3)
    assert jnp.allclose(out['decode_init'], dec_ref, atol=1e-3, rtol=1e-3)

    # Also exercise the eps-free (non-sampling) kernel variant.
    out2 = module(input_ret, is_sampling=False)
    jax.block_until_ready(out2['decode_init'])
    assert jnp.allclose(out2['z'], out2['mean'], atol=1e-6)
    assert jnp.allclose(out2['mean'], mean_ref, atol=2e-3, rtol=2e-3)

    print("KERNEL_OK")
</pallas_src>

<mosaic_0001>
module attributes {stable_mosaic.version = 11 : i64} {
  func.func @_latent_kernel(%arg0: i32, %arg1: memref<2x2x32xbf16, #tpu.memory_space<vmem>>, %arg2: memref<2x32x256xbf16, #tpu.memory_space<vmem>>, %arg3: memref<1x256xf32, #tpu.memory_space<vmem>>, %arg4: memref<2x128x32xbf16, #tpu.memory_space<vmem>>, %arg5: memref<2x1x32xf32, #tpu.memory_space<vmem>>, %arg6: memref<2x128xf32, #tpu.memory_space<vmem>>, %arg7: memref<2x256xf32, #tpu.memory_space<vmem>>, %arg8: memref<2x128xf32, #tpu.memory_space<vmem>>, %arg9: memref<2x2x32xf32, #tpu.memory_space<vmem>>) attributes {dimension_semantics = [#tpu.dimension_semantics<parallel>], iteration_bounds = array<i64: 1>, scalar_prefetch = 0 : i64, scratch_operands = 0 : i64, tpu.core_type = #tpu.core_type<tc>, window_params = [{transform_indices = @transform_0, window_bounds = array<i64: 2, 2, 32>}, {pipeline_mode = #tpu.pipeline_mode<synchronous>, transform_indices = @transform_1, window_bounds = array<i64: 2, 32, 256>}, {pipeline_mode = #tpu.pipeline_mode<synchronous>, transform_indices = @transform_2, window_bounds = array<i64: 1, 256>}, {pipeline_mode = #tpu.pipeline_mode<synchronous>, transform_indices = @transform_3, window_bounds = array<i64: 2, 128, 32>}, {pipeline_mode = #tpu.pipeline_mode<synchronous>, transform_indices = @transform_4, window_bounds = array<i64: 2, 1, 32>}, {transform_indices = @transform_5, window_bounds = array<i64: 2, 128>}, {transform_indices = @transform_6, window_bounds = array<i64: 2, 256>}, {transform_indices = @transform_7, window_bounds = array<i64: 2, 128>}, {transform_indices = @transform_8, window_bounds = array<i64: 2, 2, 32>}]} {
    %c0 = arith.constant 0 : index
    %c0_0 = arith.constant 0 : index
    %c0_1 = arith.constant 0 : index
    %0 = vector.load %arg1[%c0, %c0_0, %c0_1] : memref<2x2x32xbf16, #tpu.memory_space<vmem>>, vector<1x2x32xbf16>
    %1 = vector.shape_cast %0 : vector<1x2x32xbf16> to vector<2x32xbf16>
    %c0_2 = arith.constant 0 : index
    %c0_3 = arith.constant 0 : index
    %c0_4 = arith.constant 0 : index
    %2 = vector.load %arg2[%c0_2, %c0_3, %c0_4] : memref<2x32x256xbf16, #tpu.memory_space<vmem>>, vector<1x32x256xbf16>
    %3 = vector.shape_cast %2 : vector<1x32x256xbf16> to vector<32x256xbf16>
    %cst = arith.constant dense<0.000000e+00> : vector<2x256xf32>
    %4 = tpu.matmul %1, %3, %cst {dimension_numbers = #tpu.dot_dimension_numbers<[1], [0], [0], [1], [0, 0, 1, 1], [], []>} : vector<2x32xbf16>, vector<32x256xbf16>, vector<2x256xf32> -> vector<2x256xf32>
    %c1 = arith.constant 1 : index
    %c0_5 = arith.constant 0 : index
    %c0_6 = arith.constant 0 : index
    %5 = vector.load %arg1[%c1, %c0_5, %c0_6] : memref<2x2x32xbf16, #tpu.memory_space<vmem>>, vector<1x2x32xbf16>
    %6 = vector.shape_cast %5 : vector<1x2x32xbf16> to vector<2x32xbf16>
    %c1_7 = arith.constant 1 : index
    %c0_8 = arith.constant 0 : index
    %c0_9 = arith.constant 0 : index
    %7 = vector.load %arg2[%c1_7, %c0_8, %c0_9] : memref<2x32x256xbf16, #tpu.memory_space<vmem>>, vector<1x32x256xbf16>
    %8 = vector.shape_cast %7 : vector<1x32x256xbf16> to vector<32x256xbf16>
    %cst_10 = arith.constant dense<0.000000e+00> : vector<2x256xf32>
    %9 = tpu.matmul %6, %8, %cst_10 {dimension_numbers = #tpu.dot_dimension_numbers<[1], [0], [0], [1], [0, 0, 1, 1], [], []>} : vector<2x32xbf16>, vector<32x256xbf16>, vector<2x256xf32> -> vector<2x256xf32>
    %10 = arith.addf %4, %9 : vector<2x256xf32>
    %c0_11 = arith.constant 0 : index
    %c0_12 = arith.constant 0 : index
    %11 = vector.load %arg3[%c0_11, %c0_12] : memref<1x256xf32, #tpu.memory_space<vmem>>, vector<1x256xf32>
    %12 = vector.broadcast %11 : vector<1x256xf32> to vector<2x256xf32>
    %13 = arith.addf %10, %12 : vector<2x256xf32>
    %c0_13 = arith.constant 0 : index
    %c0_14 = arith.constant 0 : index
    %14 = vector.load %arg7[%c0_13, %c0_14] : memref<2x256xf32, #tpu.memory_space<vmem>>, vector<2x256xf32>
    tpu.vector_store %arg7[%c0_13, %c0_14], %13 {strides = array<i32>} : memref<2x256xf32, #tpu.memory_space<vmem>>, vector<2x256xf32>,
    %15 = vector.extract_strided_slice %13 {offsets = [0, 0], sizes = [2, 128], strides = [1, 1]} : vector<2x256xf32> to vector<2x128xf32>
    %16 = vector.extract_strided_slice %13 {offsets = [0, 128], sizes = [2, 128], strides = [1, 1]} : vector<2x256xf32> to vector<2x128xf32>
    %c0_15 = arith.constant 0 : index
    %c0_16 = arith.constant 0 : index
    %17 = vector.load %arg6[%c0_15, %c0_16] : memref<2x128xf32, #tpu.memory_space<vmem>>, vector<2x128xf32>
    %cst_17 = arith.constant 5.000000e-01 : f32
    %18 = vector.broadcast %cst_17 : f32 to vector<2x128xf32>
    %19 = arith.mulf %18, %16 : vector<2x128xf32>
    %20 = math.exp %19 : vector<2x128xf32>
    %21 = arith.mulf %17, %20 : vector<2x128xf32>
    %22 = arith.addf %15, %21 : vector<2x128xf32>
    %c0_18 = arith.constant 0 : index
    %c0_19 = arith.constant 0 : index
    %23 = vector.load %arg8[%c0_18, %c0_19] : memref<2x128xf32, #tpu.memory_space<vmem>>, vector<2x128xf32>
    tpu.vector_store %arg8[%c0_18, %c0_19], %22 {strides = array<i32>} : memref<2x128xf32, #tpu.memory_space<vmem>>, vector<2x128xf32>,
    %24 = arith.truncf %22 : vector<2x128xf32> to vector<2x128xbf16>
    %c0_20 = arith.constant 0 : index
    %c0_21 = arith.constant 0 : index
    %c0_22 = arith.constant 0 : index
    %25 = vector.load %arg4[%c0_20, %c0_21, %c0_22] : memref<2x128x32xbf16, #tpu.memory_space<vmem>>, vector<1x128x32xbf16>
    %26 = vector.shape_cast %25 : vector<1x128x32xbf16> to vector<128x32xbf16>
    %cst_23 = arith.constant dense<0.000000e+00> : vector<2x32xf32>
    %27 = tpu.matmul %24, %26, %cst_23 {dimension_numbers = #tpu.dot_dimension_numbers<[1], [0], [0], [1], [0, 0, 1, 1], [], []>} : vector<2x128xbf16>, vector<128x32xbf16>, vector<2x32xf32> -> vector<2x32xf32>
    %c0_24 = arith.constant 0 : index
    %c0_25 = arith.constant 0 : index
    %c0_26 = arith.constant 0 : index
    %28 = vector.load %arg5[%c0_24, %c0_25, %c0_26] : memref<2x1x32xf32, #tpu.memory_space<vmem>>, vector<1x1x32xf32>
    %29 = vector.shape_cast %28 : vector<1x1x32xf32> to vector<1x32xf32>
    %30 = vector.broadcast %29 : vector<1x32xf32> to vector<2x32xf32>
    %31 = arith.addf %27, %30 : vector<2x32xf32>
    %c0_27 = arith.constant 0 : index
    %c0_28 = arith.constant 0 : index
    %c0_29 = arith.constant 0 : index
    %32 = vector.load %arg9[%c0_27, %c0_28, %c0_29] : memref<2x2x32xf32, #tpu.memory_space<vmem>>, vector<1x2x32xf32>
    %33 = vector.shape_cast %32 : vector<1x2x32xf32> to vector<2x32xf32>
    %34 = vector.shape_cast %31 : vector<2x32xf32> to vector<1x2x32xf32>
    tpu.vector_store %arg9[%c0_27, %c0_28, %c0_29], %34 {strides = array<i32>} : memref<2x2x32xf32, #tpu.memory_space<vmem>>, vector<1x2x32xf32>,
    %c1_30 = arith.constant 1 : index
    %c0_31 = arith.constant 0 : index
    %c0_32 = arith.constant 0 : index
    %35 = vector.load %arg4[%c1_30, %c0_31, %c0_32] : memref<2x128x32xbf16, #tpu.memory_space<vmem>>, vector<1x128x32xbf16>
    %36 = vector.shape_cast %35 : vector<1x128x32xbf16> to vector<128x32xbf16>
    %cst_33 = arith.constant dense<0.000000e+00> : vector<2x32xf32>
    %37 = tpu.matmul %24, %36, %cst_33 {dimension_numbers = #tpu.dot_dimension_numbers<[1], [0], [0], [1], [0, 0, 1, 1], [], []>} : vector<2x128xbf16>, vector<128x32xbf16>, vector<2x32xf32> -> vector<2x32xf32>
    %c1_34 = arith.constant 1 : index
    %c0_35 = arith.constant 0 : index
    %c0_36 = arith.constant 0 : index
    %38 = vector.load %arg5[%c1_34, %c0_35, %c0_36] : memref<2x1x32xf32, #tpu.memory_space<vmem>>, vector<1x1x32xf32>
    %39 = vector.shape_cast %38 : vector<1x1x32xf32> to vector<1x32xf32>
    %40 = vector.broadcast %39 : vector<1x32xf32> to vector<2x32xf32>
    %41 = arith.addf %37, %40 : vector<2x32xf32>
    %c1_37 = arith.constant 1 : index
    %c0_38 = arith.constant 0 : index
    %c0_39 = arith.constant 0 : index
    %42 = vector.load %arg9[%c1_37, %c0_38, %c0_39] : memref<2x2x32xf32, #tpu.memory_space<vmem>>, vector<1x2x32xf32>
    %43 = vector.shape_cast %42 : vector<1x2x32xf32> to vector<2x32xf32>
    %44 = vector.shape_cast %41 : vector<2x32xf32> to vector<1x2x32xf32>
    tpu.vector_store %arg9[%c1_37, %c0_38, %c0_39], %44 {strides = array<i32>} : memref<2x2x32xf32, #tpu.memory_space<vmem>>, vector<1x2x32xf32>,
    return
  }
  func.func @transform_0(%arg0: i32) -> (i32, i32, i32) {
    %c0_i32 = arith.constant 0 : i32
    %c0_i32_0 = arith.constant 0 : i32
    %c0_i32_1 = arith.constant 0 : i32
    return %c0_i32, %arg0, %c0_i32_0 : i32, i32, i32
  }
  func.func @transform_1(%arg0: i32) -> (i32, i32, i32) {
    %c0_i32 = arith.constant 0 : i32
    %c0_i32_0 = arith.constant 0 : i32
    %c0_i32_1 = arith.constant 0 : i32
    %c0_i32_2 = arith.constant 0 : i32
    return %c0_i32, %c0_i32_0, %c0_i32_1 : i32, i32, i32
  }
  func.func @transform_2(%arg0: i32) -> (i32, i32) {
    %c0_i32 = arith.constant 0 : i32
    %c0_i32_0 = arith.constant 0 : i32
    %c0_i32_1 = arith.constant 0 : i32
    return %c0_i32, %c0_i32_0 : i32, i32
  }
  func.func @transform_3(%arg0: i32) -> (i32, i32, i32) {
    %c0_i32 = arith.constant 0 : i32
    %c0_i32_0 = arith.constant 0 : i32
    %c0_i32_1 = arith.constant 0 : i32
    %c0_i32_2 = arith.constant 0 : i32
    return %c0_i32, %c0_i32_0, %c0_i32_1 : i32, i32, i32
  }
  func.func @transform_4(%arg0: i32) -> (i32, i32, i32) {
    %c0_i32 = arith.constant 0 : i32
    %c0_i32_0 = arith.constant 0 : i32
    %c0_i32_1 = arith.constant 0 : i32
    %c0_i32_2 = arith.constant 0 : i32
    return %c0_i32, %c0_i32_0, %c0_i32_1 : i32, i32, i32
  }
  func.func @transform_5(%arg0: i32) -> (i32, i32) {
    %c0_i32 = arith.constant 0 : i32
    %c0_i32_0 = arith.constant 0 : i32
    return %arg0, %c0_i32 : i32, i32
  }
  func.func @transform_6(%arg0: i32) -> (i32, i32) {
    %c0_i32 = arith.constant 0 : i32
    %c0_i32_0 = arith.constant 0 : i32
    return %arg0, %c0_i32 : i32, i32
  }
  func.func @transform_7(%arg0: i32) -> (i32, i32) {
    %c0_i32 = arith.constant 0 : i32
    %c0_i32_0 = arith.constant 0 : i32
    return %arg0, %c0_i32 : i32, i32
  }
  func.func @transform_8(%arg0: i32) -> (i32, i32, i32) {
    %c0_i32 = arith.constant 0 : i32
    %c0_i32_0 = arith.constant 0 : i32
    %c0_i32_1 = arith.constant 0 : i32
    return %c0_i32, %arg0, %c0_i32_0 : i32, i32, i32
  }
}

</mosaic_0001>

<llo_original>
// kernel: tpu_custom_call.1
$region0: #{tpu_custom_call.1}
  #allocation0 [shape = 'u32[]', space=smem, size = 0x4, offset = 0x4, fixed_abs, tag = 'smem constant byte address 0x4 - core index']
  #allocation1 [shape = 'u32[144,128]{1,0:T(1,128)}', space=vmem, size = 0x12000, scoped, tag = 'internal scratch']
  %s0 = inlined_call_operand.vmem [shape: bf16[2,2,32], index: 0, kind: input, shape index: {}]
  %s1 = inlined_call_operand.vmem [shape: bf16[2,32,256], index: 1, kind: input, shape index: {}]
  %s2 = inlined_call_operand.vmem [shape: f32[1,256], index: 2, kind: input, shape index: {}]
  %s3 = inlined_call_operand.vmem [shape: bf16[2,128,32], index: 3, kind: input, shape index: {}]
  %s4 = inlined_call_operand.vmem [shape: f32[2,1,32], index: 4, kind: input, shape index: {}]
  %s5 = inlined_call_operand.vmem [shape: f32[2,128], index: 5, kind: input, shape index: {}]
  %s6 = inlined_call_operand.hbm [shape: f32[2,256], index: 6, kind: output, shape index: {0}]
  %s7 = inlined_call_operand.hbm [shape: f32[2,128], index: 7, kind: output, shape index: {1}]
  %s8 = inlined_call_operand.hbm [shape: f32[2,2,32], index: 8, kind: output, shape index: {2}]
  %9 = xla_tuple %s6, %s7, %s8
  %s10 = sld [smem:[#allocation0]]
  $region50: #{tpu_custom_call.1} parent=0
    _
  %s12 = ssub.s32 1, %s10
  %s13 = scalar_select 0, %s12, %s10
  $region1: #{tpu_custom_call.1} parent=0
    #allocation2 [shape = 'u8[2048]{0}', space=vmem, size = 0x800, scoped, tag = 'output window, operand 0, single buffered']
    #allocation3 [shape = 's32[1]{0}', space=sflag, size = 0x4, scoped, tag = 'scoped memory for tpu_custom_call.1']
    #allocation4 [shape = 'u8[1024]{0}', space=vmem, size = 0x400, scoped, tag = 'output window, operand 1, single buffered']
    #allocation5 [shape = 's32[1]{0}', space=sflag, size = 0x4, scoped, tag = 'scoped memory for tpu_custom_call.1']
    #allocation6 [shape = 'u8[2048]{0}', space=vmem, size = 0x800, scoped, tag = 'output window, operand 2, single buffered']
    %14 = vsyncpa [#allocation3], 0
    %15 = vsyncpa [#allocation5], 0
    // Predicated region
    $region2: #{tpu_custom_call.1} parent=1 // pred_check
      _
    $region3: #{tpu_custom_call.1} parent=1 // pred_check_branch
      %17 = sbr.rel (0) target = $region5
    $region4: #{tpu_custom_call.1} parent=1 // pred_region
      _
    $region5: #{tpu_custom_call.1} parent=1 // pred_fallthru
      _
    // Predicated region
    $region6: #{tpu_custom_call.1} parent=1 // pred_check
      _
    $region7: #{tpu_custom_call.1} parent=1 // pred_check_branch
      %19 = sbr.rel (0) target = $region9
    $region8: #{tpu_custom_call.1} parent=1 // pred_region
      _
    $region9: #{tpu_custom_call.1} parent=1 // pred_fallthru
      _
    // Predicated region
    $region10: #{tpu_custom_call.1} parent=1 // pred_check
      _
    $region11: #{tpu_custom_call.1} parent=1 // pred_check_branch
      %21 = sbr.rel (0) target = $region13
    $region12: #{tpu_custom_call.1} parent=1 // pred_region
      _
    $region13: #{tpu_custom_call.1} parent=1 // pred_fallthru
      _
    // Predicated region
    $region14: #{tpu_custom_call.1} parent=1 // pred_check
      _
    $region15: #{tpu_custom_call.1} parent=1 // pred_check_branch
      %23 = sbr.rel (0) target = $region17
    $region16: #{tpu_custom_call.1} parent=1 // pred_region
      _
    $region17: #{tpu_custom_call.1} parent=1 // pred_fallthru
      _
    // Predicated region
    $region18: #{tpu_custom_call.1} parent=1 // pred_check
      _
    $region19: #{tpu_custom_call.1} parent=1 // pred_check_branch
      %25 = sbr.rel (0) target = $region21
    $region20: #{tpu_custom_call.1} parent=1 // pred_region
      _
    $region21: #{tpu_custom_call.1} parent=1 // pred_fallthru
      _
    // Predicated region
    $region22: #{tpu_custom_call.1} parent=1 // pred_check
      _
    $region23: #{tpu_custom_call.1} parent=1 // pred_check_branch
      %27 = sbr.rel (0) target = $region25
    $region24: #{tpu_custom_call.1} parent=1 // pred_region
      _
    $region25: #{tpu_custom_call.1} parent=1 // pred_fallthru
      _
    %v29 = vld [vmem:[%s0] sm:$0x1]
    %v30 = vld [vmem:[%s1] sm:$0xff]
    %v31 = vld [vmem:[%s1 + $0x8] sm:$0xff]
    %v32 = vld [vmem:[%s1 + $0x10] sm:$0xff]
    %v33 = vld [vmem:[%s1 + $0x18] sm:$0xff]
    %s34 = scalar_lea.vmem %s0, 1
    %v35 = vld [vmem:[%s34] sm:$0x1]
    %s36 = scalar_lea.vmem %s1, 32
    %v37 = vld [vmem:[%s36] sm:$0xff]
    %v38 = vld [vmem:[%s36 + $0x8] sm:$0xff]
    %v39 = vld [vmem:[%s36 + $0x10] sm:$0xff]
    %v40 = vld [vmem:[%s36 + $0x18] sm:$0xff]
    %v45 = vunpack.c.l.b16 %v37
    %v46 = vunpack.c.h.b16 %v37
    %v47 = vunpack.c.l.b16 %v38
    %v48 = vunpack.c.h.b16 %v38
    %v49 = vunpack.c.l.b16 %v39
    %v50 = vunpack.c.h.b16 %v39
    %v51 = vunpack.c.l.b16 %v40
    %v52 = vunpack.c.h.b16 %v40
    %v53 = vpack.c.b16 %v47, %v45
    %v54 = vpack.c.b16 %v48, %v46
    %v55 = vpack.c.b16 %v51, %v49
    %v56 = vpack.c.b16 %v52, %v50
    %vm61 = vcmask 261120
    %v63 = vsel %vm61, %v35, 0
    %65 = vmatprep.subr.bf16.mxu0 %v54
    %66 = vmatpush1.bf16.msra.mxu0 %v53
    %67 = vmatprep.subr.bf16.mxu0 %v56
    %68 = vmatpush1.bf16.msra.mxu0 %v55
    %69 = vmatprep.subr.bf16.mxu0 0
    %70 = vmatpush1.bf16.msra.mxu0 0
    %71 = vmatprep.subr.bf16.mxu0 0
    %72 = vmatpush1.bf16.msra.mxu0 0
    %73 = vmatprep.subr.bf16.mxu0 0
    %74 = vmatpush1.bf16.msra.mxu0 0
    %75 = vmatprep.subr.bf16.mxu0 0
    %76 = vmatpush1.bf16.msra.mxu0 0
    %77 = vmatprep.subr.bf16.mxu0 0
    %78 = vmatpush1.bf16.msra.mxu0 0
    %79 = vmatprep.subr.bf16.mxu0 0
    %80 = vmatpush1.bf16.msra.mxu0 0
    %81 = vmatprep.subr.bf16.mxu0 0
    %82 = vmatpush1.bf16.msra.mxu0 0
    %83 = vmatprep.subr.bf16.mxu0 0
    %84 = vmatpush1.bf16.msra.mxu0 0
    %85 = vmatprep.subr.bf16.mxu0 0
    %86 = vmatpush1.bf16.msra.mxu0 0
    %87 = vmatprep.subr.bf16.mxu0 0
    %88 = vmatpush1.bf16.msra.mxu0 0
    %89 = vmatprep.subr.bf16.mxu0 0
    %90 = vmatpush1.bf16.msra.mxu0 0
    %91 = vmatprep.subr.bf16.mxu0 0
    %92 = vmatpush1.bf16.msra.mxu0 0
    %93 = vmatprep.subr.bf16.mxu0 0
    %94 = vmatpush1.bf16.msra.mxu0 0
    %95 = vmatprep.subr.bf16.mxu0 0
    %96 = vmatpush1.bf16.msra.mxu0 0
    %97 = vmatprep.mubr.bf16.mxu0 0
    %98 = vmatmul.mubr.bf16.gmra.mrb[0].mxu0 %v63
    %v99 = vpop.f32.mrb[0].mxu0
    %v100 = vadd.f32 0.0, %v99
    %v101 = vpop.f32.mrb[0].mxu0
    %v102 = vadd.f32 0.0, %v101
    %v103 = vpop.f32.mrb[0].mxu0
    %v104 = vpop.f32.mrb[0].mxu0
    %105 = vdwg.mxu0
    %v110 = vunpack.c.l.b16 %v30
    %v111 = vunpack.c.h.b16 %v30
    %v112 = vunpack.c.l.b16 %v31
    %v113 = vunpack.c.h.b16 %v31
    %v114 = vunpack.c.l.b16 %v32
    %v115 = vunpack.c.h.b16 %v32
    %v116 = vunpack.c.l.b16 %v33
    %v117 = vunpack.c.h.b16 %v33
    %v118 = vpack.c.b16 %v112, %v110
    %v119 = vpack.c.b16 %v113, %v111
    %v120 = vpack.c.b16 %v116, %v114
    %v121 = vpack.c.b16 %v117, %v115
    %v127 = vsel %vm61, %v29, 0
    %129 = vmatprep.subr.bf16.mxu0 %v119
    %130 = vmatpush1.bf16.msra.mxu0 %v118
    %131 = vmatprep.subr.bf16.mxu0 %v121
    %132 = vmatpush1.bf16.msra.mxu0 %v120
    %133 = vmatprep.subr.bf16.mxu0 0
    %134 = vmatpush1.bf16.msra.mxu0 0
    %135 = vmatprep.subr.bf16.mxu0 0
    %136 = vmatpush1.bf16.msra.mxu0 0
    %137 = vmatprep.subr.bf16.mxu0 0
    %138 = vmatpush1.bf16.msra.mxu0 0
    %139 = vmatprep.subr.bf16.mxu0 0
    %140 = vmatpush1.bf16.msra.mxu0 0
    %141 = vmatprep.subr.bf16.mxu0 0
    %142 = vmatpush1.bf16.msra.mxu0 0
    %143 = vmatprep.subr.bf16.mxu0 0
    %144 = vmatpush1.bf16.msra.mxu0 0
    %145 = vmatprep.subr.bf16.mxu0 0
    %146 = vmatpush1.bf16.msra.mxu0 0
    %147 = vmatprep.subr.bf16.mxu0 0
    %148 = vmatpush1.bf16.msra.mxu0 0
    %149 = vmatprep.subr.bf16.mxu0 0
    %150 = vmatpush1.bf16.msra.mxu0 0
    %151 = vmatprep.subr.bf16.mxu0 0
    %152 = vmatpush1.bf16.msra.mxu0 0
    %153 = vmatprep.subr.bf16.mxu0 0
    %154 = vmatpush1.bf16.msra.mxu0 0
    %155 = vmatprep.subr.bf16.mxu0 0
    %156 = vmatpush1.bf16.msra.mxu0 0
    %157 = vmatprep.subr.bf16.mxu0 0
    %158 = vmatpush1.bf16.msra.mxu0 0
    %159 = vmatprep.subr.bf16.mxu0 0
    %160 = vmatpush1.bf16.msra.mxu0 0
    %161 = vmatprep.mubr.bf16.mxu0 0
    %162 = vmatmul.mubr.bf16.gmra.mrb[0].mxu0 %v127
    %v163 = vpop.f32.mrb[0].mxu0
    %v164 = vadd.f32 %v100, %v163
    %v165 = vpop.f32.mrb[0].mxu0
    %v166 = vadd.f32 %v102, %v165
    %v167 = vpop.f32.mrb[0].mxu0
    %v168 = vpop.f32.mrb[0].mxu0
    %169 = vdwg.mxu0
    %v170 = vld [vmem:[%s2] sm:$0x3]
    %v172 = vlaneseq
    %v173 = vshrl.u32 %v172, 7
    %v174 = vsub.s32 0, %v173
    %v175 = vrot.slane %v170, %v174
    %v176 = vlaneseq
    %v177 = vshrl.u32 %v176, 7
    %v178 = vsub.s32 1, %v177
    %v179 = vrot.slane %v170, %v178
    %v182 = vadd.f32 %v164, %v175
    %v183 = vadd.f32 %v166, %v179
    %v186 = vcombine.low %v182, %v183
    %v188 = vunpack.c.l.s4 1983009808
    %v189 = vunpack.c.0.s8 %v188
    %v190 = vlaneseq
    %v191 = vshrl.u32 %v190, 7
    %v192 = vsub.s32 %v189, %v191
    %v193 = vrot.slane %v186, %v192
    %195 = vst [vmem:[#allocation2] sm:$0xf] %v193
    %v196 = vld [vmem:[%s5] sm:$0x3]
    %v197 = vmul.f32 %v183, 0.5
    %v198 = vmul.f32 %v197, 1.442695
    %v199 = vpow.pop %v198
    %v200 = vmul.f32 %v196, %v199
    %v201 = vadd.f32 %v182, %v200
    %202 = vst [vmem:[#allocation4] sm:$0x3] %v201
    %v203 = vpack.c.bf16 %v201, %v201
    %v204 = vld [vmem:[%s3] sm:$0xf]
    %v205 = vld [vmem:[%s3 + $0x4] sm:$0xf]
    %v206 = vld [vmem:[%s3 + $0x8] sm:$0xf]
    %v207 = vld [vmem:[%s3 + $0xc] sm:$0xf]
    %v208 = vld [vmem:[%s3 + $0x10] sm:$0xf]
    %v209 = vld [vmem:[%s3 + $0x14] sm:$0xf]
    %v210 = vld [vmem:[%s3 + $0x18] sm:$0xf]
    %v211 = vld [vmem:[%s3 + $0x1c] sm:$0xf]
    %v212 = vld [vmem:[%s3 + $0x20] sm:$0xf]
    %v213 = vld [vmem:[%s3 + $0x24] sm:$0xf]
    %v214 = vld [vmem:[%s3 + $0x28] sm:$0xf]
    %v215 = vld [vmem:[%s3 + $0x2c] sm:$0xf]
    %v216 = vld [vmem:[%s3 + $0x30] sm:$0xf]
    %v217 = vld [vmem:[%s3 + $0x34] sm:$0xf]
    %v218 = vld [vmem:[%s3 + $0x38] sm:$0xf]
    %v219 = vld [vmem:[%s3 + $0x3c] sm:$0xf]
    %v220 = vld [vmem:[%s4] sm:$0x1]
    %v222 = vlaneseq
    %v223 = vshrl.u32 %v222, 7
    %v224 = vsub.s32 0, %v223
    %v225 = vrot.slane %v220, %v224
    %v243 = vunpack.c.l.b16 %v204
    %v244 = vunpack.c.l.b16 %v205
    %v245 = vunpack.c.l.b16 %v206
    %v246 = vunpack.c.l.b16 %v207
    %v247 = vunpack.c.l.b16 %v208
    %v248 = vunpack.c.l.b16 %v209
    %v249 = vunpack.c.l.b16 %v210
    %v250 = vunpack.c.l.b16 %v211
    %v251 = vunpack.c.l.b16 %v212
    %v252 = vunpack.c.l.b16 %v213
    %v253 = vunpack.c.l.b16 %v214
    %v254 = vunpack.c.l.b16 %v215
    %v255 = vunpack.c.l.b16 %v216
    %v256 = vunpack.c.l.b16 %v217
    %v257 = vunpack.c.l.b16 %v218
    %v258 = vunpack.c.l.b16 %v219
    %v259 = vpack.c.b16 %v244, %v243
    %v260 = vpack.c.b16 %v246, %v245
    %v261 = vpack.c.b16 %v248, %v247
    %v262 = vpack.c.b16 %v250, %v249
    %v263 = vpack.c.b16 %v252, %v251
    %v264 = vpack.c.b16 %v254, %v253
    %v265 = vpack.c.b16 %v256, %v255
    %v266 = vpack.c.b16 %v258, %v257
    %275 = vmatprep.subr.bf16.mxu0 0
    %276 = vmatpush1.bf16.msra.mxu0 %v259
    %277 = vmatprep.subr.bf16.mxu0 0
    %278 = vmatpush1.bf16.msra.mxu0 %v260
    %279 = vmatprep.subr.bf16.mxu0 0
    %280 = vmatpush1.bf16.msra.mxu0 %v261
    %281 = vmatprep.subr.bf16.mxu0 0
    %282 = vmatpush1.bf16.msra.mxu0 %v262
    %283 = vmatprep.subr.bf16.mxu0 0
    %284 = vmatpush1.bf16.msra.mxu0 %v263
    %285 = vmatprep.subr.bf16.mxu0 0
    %286 = vmatpush1.bf16.msra.mxu0 %v264
    %287 = vmatprep.subr.bf16.mxu0 0
    %288 = vmatpush1.bf16.msra.mxu0 %v265
    %289 = vmatprep.subr.bf16.mxu0 0
    %290 = vmatpush1.bf16.msra.mxu0 %v266
    %291 = vmatprep.subr.bf16.mxu0 0
    %292 = vmatpush1.bf16.msra.mxu0 0
    %293 = vmatprep.subr.bf16.mxu0 0
    %294 = vmatpush1.bf16.msra.mxu0 0
    %295 = vmatprep.subr.bf16.mxu0 0
    %296 = vmatpush1.bf16.msra.mxu0 0
    %297 = vmatprep.subr.bf16.mxu0 0
    %298 = vmatpush1.bf16.msra.mxu0 0
    %299 = vmatprep.subr.bf16.mxu0 0
    %300 = vmatpush1.bf16.msra.mxu0 0
    %301 = vmatprep.subr.bf16.mxu0 0
    %302 = vmatpush1.bf16.msra.mxu0 0
    %303 = vmatprep.subr.bf16.mxu0 0
    %304 = vmatpush1.bf16.msra.mxu0 0
    %305 = vmatprep.subr.bf16.mxu0 0
    %306 = vmatpush1.bf16.msra.mxu0 0
    %307 = vmatprep.mubr.bf16.mxu0 0
    %308 = vmatmul.mubr.bf16.gmra.mrb[0].mxu0 %v203
    %v309 = vpop.f32.mrb[0].mxu0
    %v310 = vadd.f32 %v225, %v309
    %v311 = vpop.f32.mrb[0].mxu0
    %v312 = vpop.f32.mrb[0].mxu0
    %v313 = vpop.f32.mrb[0].mxu0
    %314 = vdwg.mxu0
    %vm315 = vcmask 254976
    %316 = vst.msk [vmem:[#allocation6] sm:$0x3] %vm315, %v310
    %s317 = scalar_lea.vmem %s3, 64
    %v318 = vld [vmem:[%s317] sm:$0xf]
    %v319 = vld [vmem:[%s317 + $0x4] sm:$0xf]
    %v320 = vld [vmem:[%s317 + $0x8] sm:$0xf]
    %v321 = vld [vmem:[%s317 + $0xc] sm:$0xf]
    %v322 = vld [vmem:[%s317 + $0x10] sm:$0xf]
    %v323 = vld [vmem:[%s317 + $0x14] sm:$0xf]
    %v324 = vld [vmem:[%s317 + $0x18] sm:$0xf]
    %v325 = vld [vmem:[%s317 + $0x1c] sm:$0xf]
    %v326 = vld [vmem:[%s317 + $0x20] sm:$0xf]
    %v327 = vld [vmem:[%s317 + $0x24] sm:$0xf]
    %v328 = vld [vmem:[%s317 + $0x28] sm:$0xf]
    %v329 = vld [vmem:[%s317 + $0x2c] sm:$0xf]
    %v330 = vld [vmem:[%s317 + $0x30] sm:$0xf]
    %v331 = vld [vmem:[%s317 + $0x34] sm:$0xf]
    %v332 = vld [vmem:[%s317 + $0x38] sm:$0xf]
    %v333 = vld [vmem:[%s317 + $0x3c] sm:$0xf]
    %s334 = scalar_lea.vmem %s4, 1
    %v335 = vld [vmem:[%s334] sm:$0x1]
    %v337 = vlaneseq
    %v338 = vshrl.u32 %v337, 7
    %v339 = vsub.s32 0, %v338
    %v340 = vrot.slane %v335, %v339
    %v358 = vunpack.c.l.b16 %v318
    %v359 = vunpack.c.l.b16 %v319
    %v360 = vunpack.c.l.b16 %v320
    %v361 = vunpack.c.l.b16 %v321
    %v362 = vunpack.c.l.b16 %v322
    %v363 = vunpack.c.l.b16 %v323
    %v364 = vunpack.c.l.b16 %v324
    %v365 = vunpack.c.l.b16 %v325
    %v366 = vunpack.c.l.b16 %v326
    %v367 = vunpack.c.l.b16 %v327
    %v368 = vunpack.c.l.b16 %v328
    %v369 = vunpack.c.l.b16 %v329
    %v370 = vunpack.c.l.b16 %v330
    %v371 = vunpack.c.l.b16 %v331
    %v372 = vunpack.c.l.b16 %v332
    %v373 = vunpack.c.l.b16 %v333
    %v374 = vpack.c.b16 %v359, %v358
    %v375 = vpack.c.b16 %v361, %v360
    %v376 = vpack.c.b16 %v363, %v362
    %v377 = vpack.c.b16 %v365, %v364
    %v378 = vpack.c.b16 %v367, %v366
    %v379 = vpack.c.b16 %v369, %v368
    %v380 = vpack.c.b16 %v371, %v370
    %v381 = vpack.c.b16 %v373, %v372
    %390 = vmatprep.subr.bf16.mxu0 0
    %391 = vmatpush1.bf16.msra.mxu0 %v374
    %392 = vmatprep.subr.bf16.mxu0 0
    %393 = vmatpush1.bf16.msra.mxu0 %v375
    %394 = vmatprep.subr.bf16.mxu0 0
    %395 = vmatpush1.bf16.msra.mxu0 %v376
    %396 = vmatprep.subr.bf16.mxu0 0
    %397 = vmatpush1.bf16.msra.mxu0 %v377
    %398 = vmatprep.subr.bf16.mxu0 0
    %399 = vmatpush1.bf16.msra.mxu0 %v378
    %400 = vmatprep.subr.bf16.mxu0 0
    %401 = vmatpush1.bf16.msra.mxu0 %v379
    %402 = vmatprep.subr.bf16.mxu0 0
    %403 = vmatpush1.bf16.msra.mxu0 %v380
    %404 = vmatprep.subr.bf16.mxu0 0
    %405 = vmatpush1.bf16.msra.mxu0 %v381
    %406 = vmatprep.subr.bf16.mxu0 0
    %407 = vmatpush1.bf16.msra.mxu0 0
    %408 = vmatprep.subr.bf16.mxu0 0
    %409 = vmatpush1.bf16.msra.mxu0 0
    %410 = vmatprep.subr.bf16.mxu0 0
    %411 = vmatpush1.bf16.msra.mxu0 0
    %412 = vmatprep.subr.bf16.mxu0 0
    %413 = vmatpush1.bf16.msra.mxu0 0
    %414 = vmatprep.subr.bf16.mxu0 0
    %415 = vmatpush1.bf16.msra.mxu0 0
    %416 = vmatprep.subr.bf16.mxu0 0
    %417 = vmatpush1.bf16.msra.mxu0 0
    %418 = vmatprep.subr.bf16.mxu0 0
    %419 = vmatpush1.bf16.msra.mxu0 0
    %420 = vmatprep.subr.bf16.mxu0 0
    %421 = vmatpush1.bf16.msra.mxu0 0
    %422 = vmatprep.mubr.bf16.mxu0 0
    %423 = vmatmul.mubr.bf16.gmra.mrb[0].mxu0 %v203
    %v424 = vpop.f32.mrb[0].mxu0
    %v425 = vadd.f32 %v340, %v424
    %v426 = vpop.f32.mrb[0].mxu0
    %v427 = vpop.f32.mrb[0].mxu0
    %v428 = vpop.f32.mrb[0].mxu0
    %429 = vdwg.mxu0
    %s430 = scalar_lea.vmem [#allocation6], 2
    %431 = vst.msk [vmem:[%s430] sm:$0x3] %vm315, %v425
    // Predicated region
    $region26: #{tpu_custom_call.1} parent=1 // pred_check
      _
    $region27: #{tpu_custom_call.1} parent=1 // pred_check_branch
      %433 = sbr.rel (0) target = $region29
    $region28: #{tpu_custom_call.1} parent=1 // pred_region
      %s435 = ssub.s32 64, 64
      %436 = vsyncadd [#allocation3], %s435
      %s438 = sshll.u32 [#allocation2], 4
      %s439 = int_to_ptr.vmem [resolvable:$true] %s438
      %441 = dma.vmem_to_hbm [thread:$0]  %s439, 64, %s6, [#allocation3]
    $region29: #{tpu_custom_call.1} parent=1 // pred_fallthru
      _
    // Predicated region
    $region30: #{tpu_custom_call.1} parent=1 // pred_check
      _
    $region31: #{tpu_custom_call.1} parent=1 // pred_check_branch
      %443 = sbr.rel (0) target = $region33
    $region32: #{tpu_custom_call.1} parent=1 // pred_region
      %s445 = ssub.s32 32, 32
      %446 = vsyncadd [#allocation5], %s445
      %s448 = sshll.u32 [#allocation4], 4
      %s449 = int_to_ptr.vmem [resolvable:$true] %s448
      %451 = dma.vmem_to_hbm [thread:$0]  %s449, 32, %s7, [#allocation5]
    $region33: #{tpu_custom_call.1} parent=1 // pred_fallthru
      _
    // Predicated region
    $region34: #{tpu_custom_call.1} parent=1 // pred_check
      _
    $region35: #{tpu_custom_call.1} parent=1 // pred_check_branch
      %453 = sbr.rel (0) target = $region37
    $region36: #{tpu_custom_call.1} parent=1 // pred_region
      %s455 = ssub.s32 64, 64
      %456 = vsyncadd [#allocation5], %s455
      %s457 = sshll.u32 [#allocation6], 4
      %s458 = int_to_ptr.vmem [resolvable:$true] %s457
      %463 = dma.vmem_to_hbm [thread:$0]  %s458, 64, %s8, [#allocation5], 32, 32, 2
    $region37: #{tpu_custom_call.1} parent=1 // pred_fallthru
      _
    // Predicated region
    $region38: #{tpu_custom_call.1} parent=1 // pred_check
      _
    $region39: #{tpu_custom_call.1} parent=1 // pred_check_branch
      %465 = sbr.rel (0) target = $region41
    $region40: #{tpu_custom_call.1} parent=1 // pred_region
      %466 = dma.done [#allocation3], 64
    $region41: #{tpu_custom_call.1} parent=1 // pred_fallthru
      _
    // Predicated region
    $region42: #{tpu_custom_call.1} parent=1 // pred_check
      _
    $region43: #{tpu_custom_call.1} parent=1 // pred_check_branch
      %468 = sbr.rel (0) target = $region45
    $region44: #{tpu_custom_call.1} parent=1 // pred_region
      %469 = dma.done [#allocation5], 32
    $region45: #{tpu_custom_call.1} parent=1 // pred_fallthru
      _
    // Predicated region
    $region46: #{tpu_custom_call.1} parent=1 // pred_check
      _
    $region47: #{tpu_custom_call.1} parent=1 // pred_check_branch
      %471 = sbr.rel (0) target = $region49
    $region48: #{tpu_custom_call.1} parent=1 // pred_region
      %472 = dma.done [#allocation5], 64
    $region49: #{tpu_custom_call.1} parent=1 // pred_fallthru
      _
    %473 = vsyncpa [#allocation3], 1
    %474 = vsyncpa [#allocation5], 1

</llo_original>
